<compile_context>
chip_gen: v7x
topology: tpu7x:2x2x1
jax: 0.10.0
libtpu: 0.0.40
codegen_flags: <defaults>
</compile_context>

<pallas_src>
import jax
import jax.numpy as jnp
from jax.experimental import pallas as pl
from jax.experimental.pallas import tpu as pltpu


# ---------------------------------------------------------------------------
# Kernel
# ---------------------------------------------------------------------------
def encoder_kernel(x_ref, w1_ref, b1_ref, w2_ref, b2_ref, w3_ref, b3_ref, out_ref):
    # x / w* are bf16; accumulate in f32 on the MXU; epilogue in f32.
    x = x_ref[...]                                                   # (TB, In_p) bf16
    h1 = jnp.dot(x, w1_ref[...], preferred_element_type=jnp.float32)
    h1 = jnp.maximum(h1 + b1_ref[...], 0.0)                          # f32 ReLU
    h2 = jnp.dot(h1.astype(jnp.bfloat16), w2_ref[...],
                 preferred_element_type=jnp.float32)
    h2 = jnp.maximum(h2 + b2_ref[...], 0.0)                          # f32 ReLU
    z = jnp.dot(h2.astype(jnp.bfloat16), w3_ref[...],
                preferred_element_type=jnp.float32)
    z = jnp.maximum(z + b3_ref[...], 0.0)                            # f32 ReLU
    out_ref[...] = z.astype(out_ref.dtype)


# ---------------------------------------------------------------------------
# Helpers
# ---------------------------------------------------------------------------
def _round_up(x, m):
    return (x + m - 1) // m * m


def _pick_batch_tile(B, tile_b):
    """Large tiles for throughput, but >= 2 grid steps when B allows (v7x: 2 TCs)."""
    if B >= 2 * tile_b:
        return tile_b
    half = _round_up(pl.cdiv(B, 2), 8)
    if B >= 16:
        return min(tile_b, half)
    return _round_up(max(B, 1), 8)


# ---------------------------------------------------------------------------
# Wrapper
# ---------------------------------------------------------------------------
def encoder_forward(x, params, *, tile_b=512):
    """x: (B, in_size) float32. params: dict of w1,b1,w2,b2,w3,b3 (f32,
    weights stored [in_features, out_features])."""
    B, in_size = x.shape
    h1 = params["w1"].shape[1]
    h2 = params["w2"].shape[1]
    latent = params["w3"].shape[1]

    # Lane-dense padded feature dims (multiples of 128).
    in_p = _round_up(in_size, 128)
    h1_p = _round_up(h1, 128)
    h2_p = _round_up(h2, 128)
    lat_p = _round_up(latent, 128)

    tile = _pick_batch_tile(B, tile_b)
    Bp = _round_up(B, tile)
    grid = (Bp // tile,)

    # Zero-pad + cast operands: activations/weights -> bf16, biases -> f32.
    x_p = jnp.zeros((Bp, in_p), jnp.bfloat16).at[:B, :in_size].set(
        x.astype(jnp.bfloat16))
    w1_p = jnp.zeros((in_p, h1_p), jnp.bfloat16).at[:in_size, :h1].set(
        params["w1"].astype(jnp.bfloat16))
    w2_p = jnp.zeros((h1_p, h2_p), jnp.bfloat16).at[:h1, :h2].set(
        params["w2"].astype(jnp.bfloat16))
    w3_p = jnp.zeros((h2_p, lat_p), jnp.bfloat16).at[:h2, :latent].set(
        params["w3"].astype(jnp.bfloat16))
    b1_p = jnp.zeros((1, h1_p), jnp.float32).at[:, :h1].set(
        params["b1"].reshape(1, h1).astype(jnp.float32))
    b2_p = jnp.zeros((1, h2_p), jnp.float32).at[:, :h2].set(
        params["b2"].reshape(1, h2).astype(jnp.float32))
    b3_p = jnp.zeros((1, lat_p), jnp.float32).at[:, :latent].set(
        params["b3"].reshape(1, latent).astype(jnp.float32))

    # VMEM budget: resident weights (assume double-buffered), double-buffered
    # I/O tiles, f32+bf16 intermediates; 2x headroom, capped < v7x physical.
    weight_bytes = (in_p * h1_p + h1_p * h2_p + h2_p * lat_p) * 2 \
        + (h1_p + h2_p + lat_p) * 4
    io_bytes = 2 * tile * in_p * 2 + 2 * tile * lat_p * 4
    act_bytes = tile * (h1_p + h2_p) * (4 + 2)
    vmem_need = 2 * weight_bytes + io_bytes + act_bytes
    vmem_limit = int(min(max(2 * vmem_need, 16 * 1024 * 1024), 48 * 1024 * 1024))

    def full2d(shape):
        # Whole-array block, same block every grid step (weights stay resident).
        return pl.BlockSpec(shape, lambda i: (0, 0))

    out_p = pl.pallas_call(
        encoder_kernel,
        out_shape=jax.ShapeDtypeStruct((Bp, lat_p), jnp.float32),
        grid_spec=pltpu.PrefetchScalarGridSpec(
            num_scalar_prefetch=0,
            grid=grid,
            in_specs=[
                pl.BlockSpec((tile, in_p), lambda i: (i, 0)),   # x tile
                full2d((in_p, h1_p)), full2d((1, h1_p)),        # layer 1
                full2d((h1_p, h2_p)), full2d((1, h2_p)),        # layer 2
                full2d((h2_p, lat_p)), full2d((1, lat_p)),      # layer 3
            ],
            out_specs=pl.BlockSpec((tile, lat_p), lambda i: (i, 0)),
        ),
        compiler_params=pltpu.CompilerParams(
            dimension_semantics=("parallel",),
            vmem_limit_bytes=vmem_limit,
        ),
    )(x_p, w1_p, b1_p, w2_p, b2_p, w3_p, b3_p)

    return out_p[:B, :latent]


# ---------------------------------------------------------------------------
# Params / reference
# ---------------------------------------------------------------------------
def init_encoder_params(key, in_size, latent_size):
    """Deterministic init matching nn.Linear shapes of the PyTorch module.
    Weights kept as [in_features, out_features] (transposed vs. torch)."""
    h1 = in_size // 2
    h2 = in_size // 4
    ks = jax.random.split(key, 6)

    def uniform(k, shape, fan_in):
        bound = 1.0 / jnp.sqrt(fan_in)
        return jax.random.uniform(k, shape, jnp.float32, -bound, bound)

    return {
        "w1": uniform(ks[0], (in_size, h1), in_size),
        "b1": uniform(ks[1], (1, h1), in_size),
        "w2": uniform(ks[2], (h1, h2), h1),
        "b2": uniform(ks[3], (1, h2), h1),
        "w3": uniform(ks[4], (h2, latent_size), h2),
        "b3": uniform(ks[5], (1, latent_size), h2),
    }


def encoder_reference(x, p):
    h1 = jnp.maximum(x @ p["w1"] + p["b1"], 0.0)
    h2 = jnp.maximum(h1 @ p["w2"] + p["b2"], 0.0)
    return jnp.maximum(h2 @ p["w3"] + p["b3"], 0.0)


# ---------------------------------------------------------------------------
# Test
# ---------------------------------------------------------------------------
if __name__ == "__main__":
    key = jax.random.PRNGKey(0)
    in_size = 32
    latent_size = 4
    batch = 16

    k_x, k_p = jax.random.split(key)
    x = jax.random.normal(k_x, (batch, in_size), jnp.float32)
    params = init_encoder_params(k_p, in_size, latent_size)

    z = encoder_forward(x, params)
    z = jax.block_until_ready(z)

    z_ref = encoder_reference(x, params)
    assert z.shape == (batch, latent_size)
    # bf16 matmul operands with f32 accumulation -> loosened tolerance vs f32 ref.
    assert jnp.allclose(z, z_ref, atol=5e-2, rtol=5e-2), float(
        jnp.max(jnp.abs(z - z_ref)))

    print("KERNEL_OK")
</pallas_src>

<mosaic_0001>
module attributes {stable_mosaic.version = 11 : i64} {
  func.func @encoder_kernel(%arg0: i32, %arg1: memref<8x128xbf16, #tpu.memory_space<vmem>>, %arg2: memref<128x128xbf16, #tpu.memory_space<vmem>>, %arg3: memref<1x128xf32, #tpu.memory_space<vmem>>, %arg4: memref<128x128xbf16, #tpu.memory_space<vmem>>, %arg5: memref<1x128xf32, #tpu.memory_space<vmem>>, %arg6: memref<128x128xbf16, #tpu.memory_space<vmem>>, %arg7: memref<1x128xf32, #tpu.memory_space<vmem>>, %arg8: memref<8x128xf32, #tpu.memory_space<vmem>>) attributes {dimension_semantics = [#tpu.dimension_semantics<parallel>], iteration_bounds = array<i64: 2>, scalar_prefetch = 0 : i64, scratch_operands = 0 : i64, tpu.core_type = #tpu.core_type<tc>, window_params = [{transform_indices = @transform_0, window_bounds = array<i64: 8, 128>}, {pipeline_mode = #tpu.pipeline_mode<synchronous>, transform_indices = @transform_1, window_bounds = array<i64: 128, 128>}, {pipeline_mode = #tpu.pipeline_mode<synchronous>, transform_indices = @transform_2, window_bounds = array<i64: 1, 128>}, {pipeline_mode = #tpu.pipeline_mode<synchronous>, transform_indices = @transform_3, window_bounds = array<i64: 128, 128>}, {pipeline_mode = #tpu.pipeline_mode<synchronous>, transform_indices = @transform_4, window_bounds = array<i64: 1, 128>}, {pipeline_mode = #tpu.pipeline_mode<synchronous>, transform_indices = @transform_5, window_bounds = array<i64: 128, 128>}, {pipeline_mode = #tpu.pipeline_mode<synchronous>, transform_indices = @transform_6, window_bounds = array<i64: 1, 128>}, {transform_indices = @transform_7, window_bounds = array<i64: 8, 128>}]} {
    %c0 = arith.constant 0 : index
    %c0_0 = arith.constant 0 : index
    %0 = vector.load %arg1[%c0, %c0_0] : memref<8x128xbf16, #tpu.memory_space<vmem>>, vector<8x128xbf16>
    %c0_1 = arith.constant 0 : index
    %c0_2 = arith.constant 0 : index
    %1 = vector.load %arg2[%c0_1, %c0_2] : memref<128x128xbf16, #tpu.memory_space<vmem>>, vector<128x128xbf16>
    %cst = arith.constant dense<0.000000e+00> : vector<8x128xf32>
    %2 = tpu.matmul %0, %1, %cst {dimension_numbers = #tpu.dot_dimension_numbers<[1], [0], [0], [1], [0, 0, 1, 1], [], []>} : vector<8x128xbf16>, vector<128x128xbf16>, vector<8x128xf32> -> vector<8x128xf32>
    %c0_3 = arith.constant 0 : index
    %c0_4 = arith.constant 0 : index
    %3 = vector.load %arg3[%c0_3, %c0_4] : memref<1x128xf32, #tpu.memory_space<vmem>>, vector<1x128xf32>
    %4 = vector.broadcast %3 : vector<1x128xf32> to vector<8x128xf32>
    %5 = arith.addf %2, %4 : vector<8x128xf32>
    %cst_5 = arith.constant 0.000000e+00 : f32
    %6 = vector.broadcast %cst_5 : f32 to vector<8x128xf32>
    %7 = arith.maximumf %5, %6 : vector<8x128xf32>
    %8 = arith.truncf %7 : vector<8x128xf32> to vector<8x128xbf16>
    %c0_6 = arith.constant 0 : index
    %c0_7 = arith.constant 0 : index
    %9 = vector.load %arg4[%c0_6, %c0_7] : memref<128x128xbf16, #tpu.memory_space<vmem>>, vector<128x128xbf16>
    %cst_8 = arith.constant dense<0.000000e+00> : vector<8x128xf32>
    %10 = tpu.matmul %8, %9, %cst_8 {dimension_numbers = #tpu.dot_dimension_numbers<[1], [0], [0], [1], [0, 0, 1, 1], [], []>} : vector<8x128xbf16>, vector<128x128xbf16>, vector<8x128xf32> -> vector<8x128xf32>
    %c0_9 = arith.constant 0 : index
    %c0_10 = arith.constant 0 : index
    %11 = vector.load %arg5[%c0_9, %c0_10] : memref<1x128xf32, #tpu.memory_space<vmem>>, vector<1x128xf32>
    %12 = vector.broadcast %11 : vector<1x128xf32> to vector<8x128xf32>
    %13 = arith.addf %10, %12 : vector<8x128xf32>
    %cst_11 = arith.constant 0.000000e+00 : f32
    %14 = vector.broadcast %cst_11 : f32 to vector<8x128xf32>
    %15 = arith.maximumf %13, %14 : vector<8x128xf32>
    %16 = arith.truncf %15 : vector<8x128xf32> to vector<8x128xbf16>
    %c0_12 = arith.constant 0 : index
    %c0_13 = arith.constant 0 : index
    %17 = vector.load %arg6[%c0_12, %c0_13] : memref<128x128xbf16, #tpu.memory_space<vmem>>, vector<128x128xbf16>
    %cst_14 = arith.constant dense<0.000000e+00> : vector<8x128xf32>
    %18 = tpu.matmul %16, %17, %cst_14 {dimension_numbers = #tpu.dot_dimension_numbers<[1], [0], [0], [1], [0, 0, 1, 1], [], []>} : vector<8x128xbf16>, vector<128x128xbf16>, vector<8x128xf32> -> vector<8x128xf32>
    %c0_15 = arith.constant 0 : index
    %c0_16 = arith.constant 0 : index
    %19 = vector.load %arg7[%c0_15, %c0_16] : memref<1x128xf32, #tpu.memory_space<vmem>>, vector<1x128xf32>
    %20 = vector.broadcast %19 : vector<1x128xf32> to vector<8x128xf32>
    %21 = arith.addf %18, %20 : vector<8x128xf32>
    %cst_17 = arith.constant 0.000000e+00 : f32
    %22 = vector.broadcast %cst_17 : f32 to vector<8x128xf32>
    %23 = arith.maximumf %21, %22 : vector<8x128xf32>
    %c0_18 = arith.constant 0 : index
    %c0_19 = arith.constant 0 : index
    %24 = vector.load %arg8[%c0_18, %c0_19] : memref<8x128xf32, #tpu.memory_space<vmem>>, vector<8x128xf32>
    tpu.vector_store %arg8[%c0_18, %c0_19], %23 {strides = array<i32>} : memref<8x128xf32, #tpu.memory_space<vmem>>, vector<8x128xf32>,
    return
  }
  func.func @transform_0(%arg0: i32) -> (i32, i32) {
    %c0_i32 = arith.constant 0 : i32
    %c0_i32_0 = arith.constant 0 : i32
    return %arg0, %c0_i32 : i32, i32
  }
  func.func @transform_1(%arg0: i32) -> (i32, i32) {
    %c0_i32 = arith.constant 0 : i32
    %c0_i32_0 = arith.constant 0 : i32
    %c0_i32_1 = arith.constant 0 : i32
    return %c0_i32, %c0_i32_0 : i32, i32
  }
  func.func @transform_2(%arg0: i32) -> (i32, i32) {
    %c0_i32 = arith.constant 0 : i32
    %c0_i32_0 = arith.constant 0 : i32
    %c0_i32_1 = arith.constant 0 : i32
    return %c0_i32, %c0_i32_0 : i32, i32
  }
  func.func @transform_3(%arg0: i32) -> (i32, i32) {
    %c0_i32 = arith.constant 0 : i32
    %c0_i32_0 = arith.constant 0 : i32
    %c0_i32_1 = arith.constant 0 : i32
    return %c0_i32, %c0_i32_0 : i32, i32
  }
  func.func @transform_4(%arg0: i32) -> (i32, i32) {
    %c0_i32 = arith.constant 0 : i32
    %c0_i32_0 = arith.constant 0 : i32
    %c0_i32_1 = arith.constant 0 : i32
    return %c0_i32, %c0_i32_0 : i32, i32
  }
  func.func @transform_5(%arg0: i32) -> (i32, i32) {
    %c0_i32 = arith.constant 0 : i32
    %c0_i32_0 = arith.constant 0 : i32
    %c0_i32_1 = arith.constant 0 : i32
    return %c0_i32, %c0_i32_0 : i32, i32
  }
  func.func @transform_6(%arg0: i32) -> (i32, i32) {
    %c0_i32 = arith.constant 0 : i32
    %c0_i32_0 = arith.constant 0 : i32
    %c0_i32_1 = arith.constant 0 : i32
    return %c0_i32, %c0_i32_0 : i32, i32
  }
  func.func @transform_7(%arg0: i32) -> (i32, i32) {
    %c0_i32 = arith.constant 0 : i32
    %c0_i32_0 = arith.constant 0 : i32
    return %arg0, %c0_i32 : i32, i32
  }
}

</mosaic_0001>

<llo_original>
// kernel: tpu_custom_call.1
$region0: #{tpu_custom_call.1}
  #allocation0 [shape = 'u32[]', space=smem, size = 0x4, offset = 0x4, fixed_abs, tag = 'smem constant byte address 0x4 - core index']
  #allocation1 [shape = 'u32[144,128]{1,0:T(1,128)}', space=vmem, size = 0x12000, scoped, tag = 'internal scratch']
  %s0 = inlined_call_operand.hbm [shape: bf16[16,128], index: 0, kind: input, shape index: {}]
  %s1 = inlined_call_operand.hbm [shape: bf16[128,128], index: 1, kind: input, shape index: {}]
  %s2 = inlined_call_operand.vmem [shape: f32[1,128], index: 2, kind: input, shape index: {}]
  %s3 = inlined_call_operand.hbm [shape: bf16[128,128], index: 3, kind: input, shape index: {}]
  %s4 = inlined_call_operand.vmem [shape: f32[1,128], index: 4, kind: input, shape index: {}]
  %s5 = inlined_call_operand.hbm [shape: bf16[128,128], index: 5, kind: input, shape index: {}]
  %s6 = inlined_call_operand.vmem [shape: f32[1,128], index: 6, kind: input, shape index: {}]
  %s7 = inlined_call_operand.hbm [shape: f32[16,128], index: 7, kind: output, shape index: {}]
  %s8 = sld [smem:[#allocation0]]
  $region77: #{tpu_custom_call.1} parent=0
    _
  %s10 = ssub.s32 1, %s8
  %s11 = scalar_select 0, %s10, %s8
  $region1: #{tpu_custom_call.1} parent=0
    #allocation2 [shape = 'u8[4096]{0}', space=vmem, size = 0x1000, scoped, tag = 'input window, operand 0']
    #allocation3 [shape = 's32[2]{0}', space=sflag, size = 0x8, scoped, tag = 'scoped memory for tpu_custom_call.1']
    #allocation4 [shape = 's32[2]{0}', space=sflag, size = 0x8, scoped, tag = 'scoped memory for tpu_custom_call.1']
    #allocation5 [shape = 'u8[32768]{0}', space=vmem, size = 0x8000, scoped, tag = 'input window, operand 1, single buffered']
    #allocation6 [shape = 's32[1]{0}', space=sflag, size = 0x4, scoped, tag = 'scoped memory for tpu_custom_call.1']
    #allocation7 [shape = 'u8[32768]{0}', space=vmem, size = 0x8000, scoped, tag = 'input window, operand 3, single buffered']
    #allocation8 [shape = 'u8[32768]{0}', space=vmem, size = 0x8000, scoped, tag = 'input window, operand 5, single buffered']
    #allocation9 [shape = 's32[1]{0}', space=sflag, size = 0x4, scoped, tag = 'scoped memory for tpu_custom_call.1']
    #allocation10 [shape = 'u8[8192]{0}', space=vmem, size = 0x2000, scoped, tag = 'output window, operand 0']
    %12 = vsyncpa [#allocation3], 0
    %s13 = scalar_lea.sflag [#allocation3], 1
    %14 = vsyncpa %s13, 0
    %15 = vsyncpa [#allocation6], 0
    %16 = vsyncpa [#allocation9], 0
    %17 = vsyncpa [#allocation4], 0
    %s18 = scalar_lea.sflag [#allocation4], 1
    %19 = vsyncpa %s18, 0
    loop: start=0, step=1, limit=4
    $region2: #{tpu_custom_call.1} parent=1 // loop_pre_header
      _
    $region3: #{tpu_custom_call.1} parent=1 // loop_header
      %s21 = sphi 0, %s25
      %p22 = scmp.ge.s32.totalorder %s21, 4
      %s31 = sphi 0, %s33
      %s34 = sphi 0, %s31
      %s35 = sphi 0, %s34
      %s51 = sphi 0, %s35
      %s55 = sphi 0, %s55
      %s57 = sphi 0, %s55
      %s58 = sphi 0, %s57
      %s72 = sphi 0, %s58
      %s76 = sphi 0, %s76
      %s78 = sphi 0, %s76
      %s79 = sphi 0, %s78
      %s93 = sphi 0, %s79
      %s97 = sphi 0, %s97
      %s99 = sphi 0, %s97
      %s100 = sphi 0, %s99
      %s114 = sphi 0, %s100
      %s118 = sphi 0, %s118
      %s120 = sphi 0, %s118
      %s121 = sphi 0, %s120
      %s135 = sphi 0, %s121
      %s139 = sphi 0, %s139
      %s141 = sphi 0, %s139
      %s142 = sphi 0, %s141
      %s156 = sphi 0, %s142
      %s160 = sphi 0, %s160
      %s162 = sphi 0, %s160
      %s163 = sphi 0, %s162
      %s177 = sphi 0, %s163
      %s183 = sphi 0, %s185
      %s186 = sphi 0, %s183
      %s187 = sphi 0, %s186
      %s203 = sphi 0, %s187
    $region4: #{tpu_custom_call.1} parent=1 // loop_header_branch
      %24 = sbr.rel (%p22) target = $region8
    $region5: #{tpu_custom_call.1} parent=1 // loop_body
      %s26 = ssub.s32 %s21, 1
      %s27 = ssub.s32 %s21, 2
      %s28 = sadd.s32 %s21, 1
      %s29 = ssub.s32 %s21, %s28
      %p30 = scmp.eq.s32.totalorder %s29, 0
      %s32 = sadd.s32 %s31, 1
      %s33 = scalar_select %p30, %s31, %s32
      %p36 = pneg %p30
      %p37 = scmp.eq.s32.totalorder %s21, 1
      %p38 = por %p36, %p37
      %p39 = scmp.ne.s32.totalorder %s31, %s34
      %p40 = scmp.eq.s32.totalorder %s21, 0
      %p41 = por %p39, %p40
      %p42 = scmp.ne.s32.totalorder %s31, %s34
      %p43 = scmp.eq.s32.totalorder %s26, 1
      %p44 = por %p42, %p43
      %p45 = scmp.ne.s32.totalorder %s34, %s35
      %p46 = scmp.eq.s32.totalorder %s26, 0
      %p47 = por %p45, %p46
      %p48 = scmp.ne.s32.totalorder %s34, %s35
      %p49 = scmp.eq.s32.totalorder %s27, 1
      %p50 = por %p48, %p49
      %p52 = scmp.ne.s32.totalorder %s35, %s51
      %p53 = scmp.eq.s32.totalorder %s27, 0
      %p54 = por %p52, %p53
      %s56 = sadd.s32 %s55, 1
      %p59 = scmp.eq.s32.totalorder %s21, 1
      %p60 = scmp.ne.s32.totalorder %s55, %s57
      %p61 = scmp.eq.s32.totalorder %s21, 0
      %p62 = por %p60, %p61
      %p63 = scmp.ne.s32.totalorder %s55, %s57
      %p64 = scmp.eq.s32.totalorder %s26, 1
      %p65 = por %p63, %p64
      %p66 = scmp.ne.s32.totalorder %s57, %s58
      %p67 = scmp.eq.s32.totalorder %s26, 0
      %p68 = por %p66, %p67
      %p69 = scmp.ne.s32.totalorder %s57, %s58
      %p70 = scmp.eq.s32.totalorder %s27, 1
      %p71 = por %p69, %p70
      %p73 = scmp.ne.s32.totalorder %s58, %s72
      %p74 = scmp.eq.s32.totalorder %s27, 0
      %p75 = por %p73, %p74
      %s77 = sadd.s32 %s76, 1
      %p80 = scmp.eq.s32.totalorder %s21, 1
      %p81 = scmp.ne.s32.totalorder %s76, %s78
      %p82 = scmp.eq.s32.totalorder %s21, 0
      %p83 = por %p81, %p82
      %p84 = scmp.ne.s32.totalorder %s76, %s78
      %p85 = scmp.eq.s32.totalorder %s26, 1
      %p86 = por %p84, %p85
      %p87 = scmp.ne.s32.totalorder %s78, %s79
      %p88 = scmp.eq.s32.totalorder %s26, 0
      %p89 = por %p87, %p88
      %p90 = scmp.ne.s32.totalorder %s78, %s79
      %p91 = scmp.eq.s32.totalorder %s27, 1
      %p92 = por %p90, %p91
      %p94 = scmp.ne.s32.totalorder %s79, %s93
      %p95 = scmp.eq.s32.totalorder %s27, 0
      %p96 = por %p94, %p95
      %s98 = sadd.s32 %s97, 1
      %p101 = scmp.eq.s32.totalorder %s21, 1
      %p102 = scmp.ne.s32.totalorder %s97, %s99
      %p103 = scmp.eq.s32.totalorder %s21, 0
      %p104 = por %p102, %p103
      %p105 = scmp.ne.s32.totalorder %s97, %s99
      %p106 = scmp.eq.s32.totalorder %s26, 1
      %p107 = por %p105, %p106
      %p108 = scmp.ne.s32.totalorder %s99, %s100
      %p109 = scmp.eq.s32.totalorder %s26, 0
      %p110 = por %p108, %p109
      %p111 = scmp.ne.s32.totalorder %s99, %s100
      %p112 = scmp.eq.s32.totalorder %s27, 1
      %p113 = por %p111, %p112
      %p115 = scmp.ne.s32.totalorder %s100, %s114
      %p116 = scmp.eq.s32.totalorder %s27, 0
      %p117 = por %p115, %p116
      %s119 = sadd.s32 %s118, 1
      %p122 = scmp.eq.s32.totalorder %s21, 1
      %p123 = scmp.ne.s32.totalorder %s118, %s120
      %p124 = scmp.eq.s32.totalorder %s21, 0
      %p125 = por %p123, %p124
      %p126 = scmp.ne.s32.totalorder %s118, %s120
      %p127 = scmp.eq.s32.totalorder %s26, 1
      %p128 = por %p126, %p127
      %p129 = scmp.ne.s32.totalorder %s120, %s121
      %p130 = scmp.eq.s32.totalorder %s26, 0
      %p131 = por %p129, %p130
      %p132 = scmp.ne.s32.totalorder %s120, %s121
      %p133 = scmp.eq.s32.totalorder %s27, 1
      %p134 = por %p132, %p133
      %p136 = scmp.ne.s32.totalorder %s121, %s135
      %p137 = scmp.eq.s32.totalorder %s27, 0
      %p138 = por %p136, %p137
      %s140 = sadd.s32 %s139, 1
      %p143 = scmp.eq.s32.totalorder %s21, 1
      %p144 = scmp.ne.s32.totalorder %s139, %s141
      %p145 = scmp.eq.s32.totalorder %s21, 0
      %p146 = por %p144, %p145
      %p147 = scmp.ne.s32.totalorder %s139, %s141
      %p148 = scmp.eq.s32.totalorder %s26, 1
      %p149 = por %p147, %p148
      %p150 = scmp.ne.s32.totalorder %s141, %s142
      %p151 = scmp.eq.s32.totalorder %s26, 0
      %p152 = por %p150, %p151
      %p153 = scmp.ne.s32.totalorder %s141, %s142
      %p154 = scmp.eq.s32.totalorder %s27, 1
      %p155 = por %p153, %p154
      %p157 = scmp.ne.s32.totalorder %s142, %s156
      %p158 = scmp.eq.s32.totalorder %s27, 0
      %p159 = por %p157, %p158
      %s161 = sadd.s32 %s160, 1
      %p164 = scmp.eq.s32.totalorder %s21, 1
      %p165 = scmp.ne.s32.totalorder %s160, %s162
      %p166 = scmp.eq.s32.totalorder %s21, 0
      %p167 = por %p165, %p166
      %p168 = scmp.ne.s32.totalorder %s160, %s162
      %p169 = scmp.eq.s32.totalorder %s26, 1
      %p170 = por %p168, %p169
      %p171 = scmp.ne.s32.totalorder %s162, %s163
      %p172 = scmp.eq.s32.totalorder %s26, 0
      %p173 = por %p171, %p172
      %p174 = scmp.ne.s32.totalorder %s162, %s163
      %p175 = scmp.eq.s32.totalorder %s27, 1
      %p176 = por %p174, %p175
      %p178 = scmp.ne.s32.totalorder %s163, %s177
      %p179 = scmp.eq.s32.totalorder %s27, 0
      %p180 = por %p178, %p179
      %s181 = ssub.s32 %s21, %s28
      %p182 = scmp.eq.s32.totalorder %s181, 0
      %s184 = sadd.s32 %s183, 1
      %s185 = scalar_select %p182, %s183, %s184
      %p188 = pneg %p182
      %p189 = scmp.eq.s32.totalorder %s21, 1
      %p190 = por %p188, %p189
      %p191 = scmp.ne.s32.totalorder %s183, %s186
      %p192 = scmp.eq.s32.totalorder %s21, 0
      %p193 = por %p191, %p192
      %p194 = scmp.ne.s32.totalorder %s183, %s186
      %p195 = scmp.eq.s32.totalorder %s26, 1
      %p196 = por %p194, %p195
      %p197 = scmp.ne.s32.totalorder %s186, %s187
      %p198 = scmp.eq.s32.totalorder %s26, 0
      %p199 = por %p197, %p198
      %p200 = scmp.ne.s32.totalorder %s186, %s187
      %p201 = scmp.eq.s32.totalorder %s27, 1
      %p202 = por %p200, %p201
      %p204 = scmp.ne.s32.totalorder %s187, %s203
      %p205 = scmp.eq.s32.totalorder %s27, 0
      %p206 = por %p204, %p205
      %p207 = scmp.le.s32.totalorder 1, %s21
      %p208 = scmp.lt.s32.totalorder %s21, 3
      %p209 = pnand %p207, %p208
      %p210 = pneg %p209
      // Predicated region
      $region9: #{tpu_custom_call.1} parent=5 // pred_check
        _
      $region10: #{tpu_custom_call.1} parent=5 // pred_check_branch
        %212 = sbr.rel (%p209) target = $region12
      $region11: #{tpu_custom_call.1} parent=5 // pred_region
        %s213 = ssub.s32 %s21, 1
        // Predicated region
        $region13: #{tpu_custom_call.1} parent=11 // pred_check
          %p214 = pneg %p68
        $region14: #{tpu_custom_call.1} parent=11 // pred_check_branch
          %216 = sbr.rel (%p214) target = $region16
        $region15: #{tpu_custom_call.1} parent=11 // pred_region
          %s218 = ssub.s32 1024, 1024
          %219 = vsyncadd [#allocation6], %s218
          %s220 = sshll.u32 [#allocation5], 4
          %s221 = int_to_ptr.vmem [resolvable:$true] %s220
          %226 = dma.hbm_to_vmem [thread:$0]  %s1, 1024, %s221, [#allocation6], 64, 64, 4
        $region16: #{tpu_custom_call.1} parent=11 // pred_fallthru
          _
        // Predicated region
        $region17: #{tpu_custom_call.1} parent=11 // pred_check
          %p227 = pneg %p89
        $region18: #{tpu_custom_call.1} parent=11 // pred_check_branch
          %229 = sbr.rel (%p227) target = $region20
        $region19: #{tpu_custom_call.1} parent=11 // pred_region
          _
        $region20: #{tpu_custom_call.1} parent=11 // pred_fallthru
          _
        // Predicated region
        $region21: #{tpu_custom_call.1} parent=11 // pred_check
          %p230 = pneg %p110
        $region22: #{tpu_custom_call.1} parent=11 // pred_check_branch
          %232 = sbr.rel (%p230) target = $region24
        $region23: #{tpu_custom_call.1} parent=11 // pred_region
          %s234 = ssub.s32 1024, 1024
          %235 = vsyncadd [#allocation6], %s234
          %s236 = sshll.u32 [#allocation7], 4
          %s237 = int_to_ptr.vmem [resolvable:$true] %s236
          %242 = dma.hbm_to_vmem [thread:$0]  %s3, 1024, %s237, [#allocation6], 64, 64, 4
        $region24: #{tpu_custom_call.1} parent=11 // pred_fallthru
          _
        // Predicated region
        $region25: #{tpu_custom_call.1} parent=11 // pred_check
          %p243 = pneg %p131
        $region26: #{tpu_custom_call.1} parent=11 // pred_check_branch
          %245 = sbr.rel (%p243) target = $region28
        $region27: #{tpu_custom_call.1} parent=11 // pred_region
          _
        $region28: #{tpu_custom_call.1} parent=11 // pred_fallthru
          _
        // Predicated region
        $region29: #{tpu_custom_call.1} parent=11 // pred_check
          %p246 = pneg %p152
        $region30: #{tpu_custom_call.1} parent=11 // pred_check_branch
          %248 = sbr.rel (%p246) target = $region32
        $region31: #{tpu_custom_call.1} parent=11 // pred_region
          %s250 = ssub.s32 1024, 1024
          %251 = vsyncadd [#allocation9], %s250
          %s252 = sshll.u32 [#allocation8], 4
          %s253 = int_to_ptr.vmem [resolvable:$true] %s252
          %258 = dma.hbm_to_vmem [thread:$0]  %s5, 1024, %s253, [#allocation9], 64, 64, 4
        $region32: #{tpu_custom_call.1} parent=11 // pred_fallthru
          _
        // Predicated region
        $region33: #{tpu_custom_call.1} parent=11 // pred_check
          %p259 = pneg %p173
        $region34: #{tpu_custom_call.1} parent=11 // pred_check_branch
          %261 = sbr.rel (%p259) target = $region36
        $region35: #{tpu_custom_call.1} parent=11 // pred_region
          _
        $region36: #{tpu_custom_call.1} parent=11 // pred_fallthru
          _
      $region12: #{tpu_custom_call.1} parent=5 // pred_fallthru
        _
      %p262 = scmp.lt.s32.totalorder %s21, 2
      // Predicated region
      $region37: #{tpu_custom_call.1} parent=5 // pred_check
        %p263 = pneg %p262
      $region38: #{tpu_custom_call.1} parent=5 // pred_check_branch
        %265 = sbr.rel (%p263) target = $region40
      $region39: #{tpu_custom_call.1} parent=5 // pred_region
        // Predicated region
        $region41: #{tpu_custom_call.1} parent=39 // pred_check
          %p266 = pneg %p41
        $region42: #{tpu_custom_call.1} parent=39 // pred_check_branch
          %268 = sbr.rel (%p266) target = $region44
        $region43: #{tpu_custom_call.1} parent=39 // pred_region
          %s269 = sand.u32 %s31, 1
          %s270 = scalar_lea.sflag [#allocation3], %s269
          %s271 = sand.u32 %s31, 1
          %s272 = smul.addr %s271, 4
          %s273 = scalar_lea.vmem [#allocation2], %s272
          %s275 = ssub.s32 64, 64
          %276 = vsyncadd %s270, %s275
          %s277 = smul.addr %s21, 64
          %s278 = scalar_lea.hbm %s0, %s277
          %s280 = sshll.u32 %s273, 4
          %s281 = int_to_ptr.vmem [resolvable:$true] %s280
          %283 = dma.hbm_to_vmem [thread:$0]  %s278, 64, %s281, %s270
        $region44: #{tpu_custom_call.1} parent=39 // pred_fallthru
          _
      $region40: #{tpu_custom_call.1} parent=5 // pred_fallthru
        _
      %p284 = scmp.le.s32.totalorder 1, %s21
      %p285 = scmp.lt.s32.totalorder %s21, 3
      %p286 = pnand %p284, %p285
      %p287 = pneg %p286
      // Predicated region
      $region45: #{tpu_custom_call.1} parent=5 // pred_check
        _
      $region46: #{tpu_custom_call.1} parent=5 // pred_check_branch
        %289 = sbr.rel (%p286) target = $region48
      $region47: #{tpu_custom_call.1} parent=5 // pred_region
        %s290 = ssub.s32 %s21, 1
        %s291 = sand.u32 %s34, 1
        %s292 = scalar_lea.sflag [#allocation3], %s291
        %s293 = sand.u32 %s34, 1
        %s294 = smul.addr %s293, 4
        %s295 = scalar_lea.vmem [#allocation2], %s294
        // Predicated region
        $region49: #{tpu_custom_call.1} parent=47 // pred_check
          %p296 = pneg %p47
        $region50: #{tpu_custom_call.1} parent=47 // pred_check_branch
          %298 = sbr.rel (%p296) target = $region52
        $region51: #{tpu_custom_call.1} parent=47 // pred_region
          %299 = dma.done %s292, 64
        $region52: #{tpu_custom_call.1} parent=47 // pred_fallthru
          _
        // Predicated region
        $region53: #{tpu_custom_call.1} parent=47 // pred_check
          %p300 = pneg %p68
        $region54: #{tpu_custom_call.1} parent=47 // pred_check_branch
          %302 = sbr.rel (%p300) target = $region56
        $region55: #{tpu_custom_call.1} parent=47 // pred_region
          %303 = dma.done [#allocation6], 1024
        $region56: #{tpu_custom_call.1} parent=47 // pred_fallthru
          _
        // Predicated region
        $region57: #{tpu_custom_call.1} parent=47 // pred_check
          %p304 = pneg %p110
        $region58: #{tpu_custom_call.1} parent=47 // pred_check_branch
          %306 = sbr.rel (%p304) target = $region60
        $region59: #{tpu_custom_call.1} parent=47 // pred_region
          %307 = dma.done [#allocation6], 1024
        $region60: #{tpu_custom_call.1} parent=47 // pred_fallthru
          _
        // Predicated region
        $region61: #{tpu_custom_call.1} parent=47 // pred_check
          %p308 = pneg %p152
        $region62: #{tpu_custom_call.1} parent=47 // pred_check_branch
          %310 = sbr.rel (%p308) target = $region64
        $region63: #{tpu_custom_call.1} parent=47 // pred_region
          %311 = dma.done [#allocation9], 1024
        $region64: #{tpu_custom_call.1} parent=47 // pred_fallthru
          _
        %s312 = sand.u32 %s34, 1
        %s313 = scalar_lea.sflag [#allocation3], %s312
        %s314 = sand.u32 %s34, 1
        %s315 = smul.addr %s314, 4
        %s316 = scalar_lea.vmem [#allocation2], %s315
        %p317 = pneg %p47
        %p318 = pneg %p44
        %p319 = pneg %p68
        %p320 = pneg %p65
        %p321 = pneg %p89
        %p322 = pneg %p86
        %p323 = pneg %p110
        %p324 = pneg %p107
        %p325 = pneg %p131
        %p326 = pneg %p128
        %p327 = pneg %p152
        %p328 = pneg %p149
        %p329 = pneg %p173
        %p330 = pneg %p170
        %p331 = pneg %p199
        %p332 = pneg %p196
        %s333 = sand.u32 %s186, 1
        %s334 = scalar_lea.sflag [#allocation4], %s333
        %s335 = sand.u32 %s186, 1
        %s336 = smul.addr %s335, 8
        %s337 = scalar_lea.vmem [#allocation10], %s336
        %v339 = vld [vmem:[%s295] sm:$0xf]
        %v340 = vld [vmem:[#allocation5] sm:$0xf]
        %v341 = vld [vmem:[#allocation5 + $0x4] sm:$0xf]
        %v342 = vld [vmem:[#allocation5 + $0x8] sm:$0xf]
        %v343 = vld [vmem:[#allocation5 + $0xc] sm:$0xf]
        %v344 = vld [vmem:[#allocation5 + $0x10] sm:$0xf]
        %v345 = vld [vmem:[#allocation5 + $0x14] sm:$0xf]
        %v346 = vld [vmem:[#allocation5 + $0x18] sm:$0xf]
        %v347 = vld [vmem:[#allocation5 + $0x1c] sm:$0xf]
        %v348 = vld [vmem:[#allocation5 + $0x20] sm:$0xf]
        %v349 = vld [vmem:[#allocation5 + $0x24] sm:$0xf]
        %v350 = vld [vmem:[#allocation5 + $0x28] sm:$0xf]
        %v351 = vld [vmem:[#allocation5 + $0x2c] sm:$0xf]
        %v352 = vld [vmem:[#allocation5 + $0x30] sm:$0xf]
        %v353 = vld [vmem:[#allocation5 + $0x34] sm:$0xf]
        %v354 = vld [vmem:[#allocation5 + $0x38] sm:$0xf]
        %v355 = vld [vmem:[#allocation5 + $0x3c] sm:$0xf]
        %v356 = vld [vmem:[%s2] sm:$0x1]
        %v358 = vlaneseq
        %v359 = vshrl.u32 %v358, 7
        %v360 = vsub.s32 0, %v359
        %v361 = vrot.slane %v356, %v360
        %v379 = vunpack.c.l.b16 %v340
        %v380 = vunpack.c.l.b16 %v341
        %v381 = vunpack.c.l.b16 %v342
        %v382 = vunpack.c.l.b16 %v343
        %v383 = vunpack.c.l.b16 %v344
        %v384 = vunpack.c.l.b16 %v345
        %v385 = vunpack.c.l.b16 %v346
        %v386 = vunpack.c.l.b16 %v347
        %v387 = vunpack.c.l.b16 %v348
        %v388 = vunpack.c.l.b16 %v349
        %v389 = vunpack.c.l.b16 %v350
        %v390 = vunpack.c.l.b16 %v351
        %v391 = vunpack.c.l.b16 %v352
        %v392 = vunpack.c.l.b16 %v353
        %v393 = vunpack.c.l.b16 %v354
        %v394 = vunpack.c.l.b16 %v355
        %v395 = vpack.c.b16 %v380, %v379
        %v396 = vpack.c.b16 %v382, %v381
        %v397 = vpack.c.b16 %v384, %v383
        %v398 = vpack.c.b16 %v386, %v385
        %v399 = vpack.c.b16 %v388, %v387
        %v400 = vpack.c.b16 %v390, %v389
        %v401 = vpack.c.b16 %v392, %v391
        %v402 = vpack.c.b16 %v394, %v393
        %411 = vmatprep.subr.bf16.mxu0 0
        %412 = vmatpush1.bf16.msra.mxu0 %v395
        %413 = vmatprep.subr.bf16.mxu0 0
        %414 = vmatpush1.bf16.msra.mxu0 %v396
        %415 = vmatprep.subr.bf16.mxu0 0
        %416 = vmatpush1.bf16.msra.mxu0 %v397
        %417 = vmatprep.subr.bf16.mxu0 0
        %418 = vmatpush1.bf16.msra.mxu0 %v398
        %419 = vmatprep.subr.bf16.mxu0 0
        %420 = vmatpush1.bf16.msra.mxu0 %v399
        %421 = vmatprep.subr.bf16.mxu0 0
        %422 = vmatpush1.bf16.msra.mxu0 %v400
        %423 = vmatprep.subr.bf16.mxu0 0
        %424 = vmatpush1.bf16.msra.mxu0 %v401
        %425 = vmatprep.subr.bf16.mxu0 0
        %426 = vmatpush1.bf16.msra.mxu0 %v402
        %427 = vmatprep.subr.bf16.mxu0 0
        %428 = vmatpush1.bf16.msra.mxu0 0
        %429 = vmatprep.subr.bf16.mxu0 0
        %430 = vmatpush1.bf16.msra.mxu0 0
        %431 = vmatprep.subr.bf16.mxu0 0
        %432 = vmatpush1.bf16.msra.mxu0 0
        %433 = vmatprep.subr.bf16.mxu0 0
        %434 = vmatpush1.bf16.msra.mxu0 0
        %435 = vmatprep.subr.bf16.mxu0 0
        %436 = vmatpush1.bf16.msra.mxu0 0
        %437 = vmatprep.subr.bf16.mxu0 0
        %438 = vmatpush1.bf16.msra.mxu0 0
        %439 = vmatprep.subr.bf16.mxu0 0
        %440 = vmatpush1.bf16.msra.mxu0 0
        %441 = vmatprep.subr.bf16.mxu0 0
        %442 = vmatpush1.bf16.msra.mxu0 0
        %443 = vmatprep.mubr.bf16.mxu0 0
        %444 = vmatmul.mubr.bf16.gmra.mrb[0].mxu0 %v339
        %v445 = vpop.f32.mrb[0].mxu0
        %v446 = vadd.f32 %v361, %v445
        %v447 = vpop.f32.mrb[0].mxu0
        %v448 = vpop.f32.mrb[0].mxu0
        %v449 = vpop.f32.mrb[0].mxu0
        %450 = vdwg.mxu0
        %v451 = vmax.f32 %v446, 0.0
        %v452 = vpack.c.bf16 %v451, %v451
        %v453 = vld [vmem:[#allocation7] sm:$0xf]
        %v454 = vld [vmem:[#allocation7 + $0x4] sm:$0xf]
        %v455 = vld [vmem:[#allocation7 + $0x8] sm:$0xf]
        %v456 = vld [vmem:[#allocation7 + $0xc] sm:$0xf]
        %v457 = vld [vmem:[#allocation7 + $0x10] sm:$0xf]
        %v458 = vld [vmem:[#allocation7 + $0x14] sm:$0xf]
        %v459 = vld [vmem:[#allocation7 + $0x18] sm:$0xf]
        %v460 = vld [vmem:[#allocation7 + $0x1c] sm:$0xf]
        %v461 = vld [vmem:[#allocation7 + $0x20] sm:$0xf]
        %v462 = vld [vmem:[#allocation7 + $0x24] sm:$0xf]
        %v463 = vld [vmem:[#allocation7 + $0x28] sm:$0xf]
        %v464 = vld [vmem:[#allocation7 + $0x2c] sm:$0xf]
        %v465 = vld [vmem:[#allocation7 + $0x30] sm:$0xf]
        %v466 = vld [vmem:[#allocation7 + $0x34] sm:$0xf]
        %v467 = vld [vmem:[#allocation7 + $0x38] sm:$0xf]
        %v468 = vld [vmem:[#allocation7 + $0x3c] sm:$0xf]
        %v469 = vld [vmem:[%s4] sm:$0x1]
        %v471 = vlaneseq
        %v472 = vshrl.u32 %v471, 7
        %v473 = vsub.s32 0, %v472
        %v474 = vrot.slane %v469, %v473
        %v492 = vunpack.c.l.b16 %v453
        %v493 = vunpack.c.l.b16 %v454
        %v494 = vunpack.c.l.b16 %v455
        %v495 = vunpack.c.l.b16 %v456
        %v496 = vunpack.c.l.b16 %v457
        %v497 = vunpack.c.l.b16 %v458
        %v498 = vunpack.c.l.b16 %v459
        %v499 = vunpack.c.l.b16 %v460
        %v500 = vunpack.c.l.b16 %v461
        %v501 = vunpack.c.l.b16 %v462
        %v502 = vunpack.c.l.b16 %v463
        %v503 = vunpack.c.l.b16 %v464
        %v504 = vunpack.c.l.b16 %v465
        %v505 = vunpack.c.l.b16 %v466
        %v506 = vunpack.c.l.b16 %v467
        %v507 = vunpack.c.l.b16 %v468
        %v508 = vpack.c.b16 %v493, %v492
        %v509 = vpack.c.b16 %v495, %v494
        %v510 = vpack.c.b16 %v497, %v496
        %v511 = vpack.c.b16 %v499, %v498
        %v512 = vpack.c.b16 %v501, %v500
        %v513 = vpack.c.b16 %v503, %v502
        %v514 = vpack.c.b16 %v505, %v504
        %v515 = vpack.c.b16 %v507, %v506
        %524 = vmatprep.subr.bf16.mxu0 0
        %525 = vmatpush1.bf16.msra.mxu0 %v508
        %526 = vmatprep.subr.bf16.mxu0 0
        %527 = vmatpush1.bf16.msra.mxu0 %v509
        %528 = vmatprep.subr.bf16.mxu0 0
        %529 = vmatpush1.bf16.msra.mxu0 %v510
        %530 = vmatprep.subr.bf16.mxu0 0
        %531 = vmatpush1.bf16.msra.mxu0 %v511
        %532 = vmatprep.subr.bf16.mxu0 0
        %533 = vmatpush1.bf16.msra.mxu0 %v512
        %534 = vmatprep.subr.bf16.mxu0 0
        %535 = vmatpush1.bf16.msra.mxu0 %v513
        %536 = vmatprep.subr.bf16.mxu0 0
        %537 = vmatpush1.bf16.msra.mxu0 %v514
        %538 = vmatprep.subr.bf16.mxu0 0
        %539 = vmatpush1.bf16.msra.mxu0 %v515
        %540 = vmatprep.subr.bf16.mxu0 0
        %541 = vmatpush1.bf16.msra.mxu0 0
        %542 = vmatprep.subr.bf16.mxu0 0
        %543 = vmatpush1.bf16.msra.mxu0 0
        %544 = vmatprep.subr.bf16.mxu0 0
        %545 = vmatpush1.bf16.msra.mxu0 0
        %546 = vmatprep.subr.bf16.mxu0 0
        %547 = vmatpush1.bf16.msra.mxu0 0
        %548 = vmatprep.subr.bf16.mxu0 0
        %549 = vmatpush1.bf16.msra.mxu0 0
        %550 = vmatprep.subr.bf16.mxu0 0
        %551 = vmatpush1.bf16.msra.mxu0 0
        %552 = vmatprep.subr.bf16.mxu0 0
        %553 = vmatpush1.bf16.msra.mxu0 0
        %554 = vmatprep.subr.bf16.mxu0 0
        %555 = vmatpush1.bf16.msra.mxu0 0
        %556 = vmatprep.mubr.bf16.mxu0 0
        %557 = vmatmul.mubr.bf16.gmra.mrb[0].mxu0 %v452
        %v558 = vpop.f32.mrb[0].mxu0
        %v559 = vadd.f32 %v474, %v558
        %v560 = vpop.f32.mrb[0].mxu0
        %v561 = vpop.f32.mrb[0].mxu0
        %v562 = vpop.f32.mrb[0].mxu0
        %563 = vdwg.mxu0
        %v564 = vmax.f32 %v559, 0.0
        %v565 = vpack.c.bf16 %v564, %v564
        %v566 = vld [vmem:[#allocation8] sm:$0xf]
        %v567 = vld [vmem:[#allocation8 + $0x4] sm:$0xf]
        %v568 = vld [vmem:[#allocation8 + $0x8] sm:$0xf]
        %v569 = vld [vmem:[#allocation8 + $0xc] sm:$0xf]
        %v570 = vld [vmem:[#allocation8 + $0x10] sm:$0xf]
        %v571 = vld [vmem:[#allocation8 + $0x14] sm:$0xf]
        %v572 = vld [vmem:[#allocation8 + $0x18] sm:$0xf]
        %v573 = vld [vmem:[#allocation8 + $0x1c] sm:$0xf]
        %v574 = vld [vmem:[#allocation8 + $0x20] sm:$0xf]
        %v575 = vld [vmem:[#allocation8 + $0x24] sm:$0xf]
        %v576 = vld [vmem:[#allocation8 + $0x28] sm:$0xf]
        %v577 = vld [vmem:[#allocation8 + $0x2c] sm:$0xf]
        %v578 = vld [vmem:[#allocation8 + $0x30] sm:$0xf]
        %v579 = vld [vmem:[#allocation8 + $0x34] sm:$0xf]
        %v580 = vld [vmem:[#allocation8 + $0x38] sm:$0xf]
        %v581 = vld [vmem:[#allocation8 + $0x3c] sm:$0xf]
        %v582 = vld [vmem:[%s6] sm:$0x1]
        %v584 = vlaneseq
        %v585 = vshrl.u32 %v584, 7
        %v586 = vsub.s32 0, %v585
        %v587 = vrot.slane %v582, %v586
        %v605 = vunpack.c.l.b16 %v566
        %v606 = vunpack.c.l.b16 %v567
        %v607 = vunpack.c.l.b16 %v568
        %v608 = vunpack.c.l.b16 %v569
        %v609 = vunpack.c.l.b16 %v570
        %v610 = vunpack.c.l.b16 %v571
        %v611 = vunpack.c.l.b16 %v572
        %v612 = vunpack.c.l.b16 %v573
        %v613 = vunpack.c.l.b16 %v574
        %v614 = vunpack.c.l.b16 %v575
        %v615 = vunpack.c.l.b16 %v576
        %v616 = vunpack.c.l.b16 %v577
        %v617 = vunpack.c.l.b16 %v578
        %v618 = vunpack.c.l.b16 %v579
        %v619 = vunpack.c.l.b16 %v580
        %v620 = vunpack.c.l.b16 %v581
        %v621 = vpack.c.b16 %v606, %v605
        %v622 = vpack.c.b16 %v608, %v607
        %v623 = vpack.c.b16 %v610, %v609
        %v624 = vpack.c.b16 %v612, %v611
        %v625 = vpack.c.b16 %v614, %v613
        %v626 = vpack.c.b16 %v616, %v615
        %v627 = vpack.c.b16 %v618, %v617
        %v628 = vpack.c.b16 %v620, %v619
        %637 = vmatprep.subr.bf16.mxu0 0
        %638 = vmatpush1.bf16.msra.mxu0 %v621
        %639 = vmatprep.subr.bf16.mxu0 0
        %640 = vmatpush1.bf16.msra.mxu0 %v622
        %641 = vmatprep.subr.bf16.mxu0 0
        %642 = vmatpush1.bf16.msra.mxu0 %v623
        %643 = vmatprep.subr.bf16.mxu0 0
        %644 = vmatpush1.bf16.msra.mxu0 %v624
        %645 = vmatprep.subr.bf16.mxu0 0
        %646 = vmatpush1.bf16.msra.mxu0 %v625
        %647 = vmatprep.subr.bf16.mxu0 0
        %648 = vmatpush1.bf16.msra.mxu0 %v626
        %649 = vmatprep.subr.bf16.mxu0 0
        %650 = vmatpush1.bf16.msra.mxu0 %v627
        %651 = vmatprep.subr.bf16.mxu0 0
        %652 = vmatpush1.bf16.msra.mxu0 %v628
        %653 = vmatprep.subr.bf16.mxu0 0
        %654 = vmatpush1.bf16.msra.mxu0 0
        %655 = vmatprep.subr.bf16.mxu0 0
        %656 = vmatpush1.bf16.msra.mxu0 0
        %657 = vmatprep.subr.bf16.mxu0 0
        %658 = vmatpush1.bf16.msra.mxu0 0
        %659 = vmatprep.subr.bf16.mxu0 0
        %660 = vmatpush1.bf16.msra.mxu0 0
        %661 = vmatprep.subr.bf16.mxu0 0
        %662 = vmatpush1.bf16.msra.mxu0 0
        %663 = vmatprep.subr.bf16.mxu0 0
        %664 = vmatpush1.bf16.msra.mxu0 0
        %665 = vmatprep.subr.bf16.mxu0 0
        %666 = vmatpush1.bf16.msra.mxu0 0
        %667 = vmatprep.subr.bf16.mxu0 0
        %668 = vmatpush1.bf16.msra.mxu0 0
        %669 = vmatprep.mubr.bf16.mxu0 0
        %670 = vmatmul.mubr.bf16.gmra.mrb[0].mxu0 %v565
        %v671 = vpop.f32.mrb[0].mxu0
        %v672 = vadd.f32 %v587, %v671
        %v673 = vpop.f32.mrb[0].mxu0
        %v674 = vpop.f32.mrb[0].mxu0
        %v675 = vpop.f32.mrb[0].mxu0
        %676 = vdwg.mxu0
        %v677 = vmax.f32 %v672, 0.0
        %678 = vst [vmem:[%s337] sm:$0xff] %v677
        %s679 = sand.u32 %s186, 1
        %s680 = scalar_lea.sflag [#allocation4], %s679
        %s681 = sand.u32 %s186, 1
        %s682 = smul.addr %s681, 8
        %s683 = scalar_lea.vmem [#allocation10], %s682
        // Predicated region
        $region65: #{tpu_custom_call.1} parent=47 // pred_check
          %p684 = pneg %p196
        $region66: #{tpu_custom_call.1} parent=47 // pred_check_branch
          %686 = sbr.rel (%p684) target = $region68
        $region67: #{tpu_custom_call.1} parent=47 // pred_region
          %s688 = ssub.s32 128, 128
          %689 = vsyncadd %s680, %s688
          %s690 = smul.addr %s26, 128
          %s691 = scalar_lea.hbm %s7, %s690
          %s693 = sshll.u32 %s683, 4
          %s694 = int_to_ptr.vmem [resolvable:$true] %s693
          %696 = dma.vmem_to_hbm [thread:$0]  %s694, 128, %s691, %s680
        $region68: #{tpu_custom_call.1} parent=47 // pred_fallthru
          _
      $region48: #{tpu_custom_call.1} parent=5 // pred_fallthru
        _
      %p697 = scmp.le.s32.totalorder 2, %s21
      // Predicated region
      $region69: #{tpu_custom_call.1} parent=5 // pred_check
        %p698 = pneg %p697
      $region70: #{tpu_custom_call.1} parent=5 // pred_check_branch
        %700 = sbr.rel (%p698) target = $region72
      $region71: #{tpu_custom_call.1} parent=5 // pred_region
        %s701 = ssub.s32 %s21, 2
        // Predicated region
        $region73: #{tpu_custom_call.1} parent=71 // pred_check
          %p702 = pneg %p202
        $region74: #{tpu_custom_call.1} parent=71 // pred_check_branch
          %704 = sbr.rel (%p702) target = $region76
        $region75: #{tpu_custom_call.1} parent=71 // pred_region
          %s705 = sand.u32 %s187, 1
          %s706 = scalar_lea.sflag [#allocation4], %s705
          %s707 = sand.u32 %s187, 1
          %s708 = smul.addr %s707, 8
          %s709 = scalar_lea.vmem [#allocation10], %s708
          %710 = dma.done %s706, 128
        $region76: #{tpu_custom_call.1} parent=71 // pred_fallthru
          _
      $region72: #{tpu_custom_call.1} parent=5 // pred_fallthru
        _
    $region6: #{tpu_custom_call.1} parent=1 // loop_footer
      %s25 = sadd.s32 1, %s21
    $region7: #{tpu_custom_call.1} parent=1 // loop_footer_branch
      %20 = sbr.rel target = $region3
    $region8: #{tpu_custom_call.1} parent=1 // loop_exit
      _
    %711 = vsyncpa [#allocation3], 1
    %s712 = scalar_lea.sflag [#allocation3], 1
    %713 = vsyncpa %s712, 1
    %714 = vsyncpa [#allocation6], 1
    %715 = vsyncpa [#allocation9], 1
    %716 = vsyncpa [#allocation4], 1
    %s717 = scalar_lea.sflag [#allocation4], 1
    %718 = vsyncpa %s717, 1

</llo_original>
